<compile_context>
chip_gen: v5e
topology: v5e:2x2
jax: 0.10.0
libtpu: 0.0.40
codegen_flags: <defaults>
</compile_context>

<pallas_src>
import jax
import jax.numpy as jnp
from jax.experimental import pallas as pl
from jax.experimental.pallas import tpu as pltpu


def _tree_prod(factors):
    """Pairwise (log-depth) product of a list of equal-shaped arrays.

    Replaces a serial multiply chain (depth O(n)) with depth O(log n), letting
    the VALU slots fill instead of stalling on one accumulator.
    """
    xs = list(factors)
    while len(xs) > 1:
        nxt = [a * b for a, b in zip(xs[0::2], xs[1::2])]
        if len(xs) % 2:
            nxt.append(xs[-1])
        xs = nxt
    return xs[0]


def gcln_dnf_kernel(xT_ref, w_andT_ref, w_orT_ref, out_ref):
    """One batch tile of the DNF network, lane-dense over the batch dim.

    xT_ref     : (V, Bt)  x^T          (batch on the lane dim)
    w_andT_ref : (K, 2V)  clipped AND weights, transposed (grid-resident)
    w_orT_ref  : (O, K)   clipped OR  weights, transposed (grid-resident)
    out_ref    : (O, Bt)  output^T     (wrapper transposes back)
    """
    xT = xT_ref[...]
    w_andT = w_andT_ref[...]
    w_orT = w_orT_ref[...]

    V = xT.shape[0]
    K = w_andT.shape[0]

    # ---- AND layer: product t-norm over the 2V literals (x_v and 1-x_v) ----
    # Positive literal term: w*x + (1-w).  Negative literal term:
    # w*(1-x) + (1-w) = 1 - w*x, so the (x, 1-x) concat is never materialized.
    terms = []
    for v in range(V):                        # V is tiny; each term is a dense (K, Bt) tile
        xv = xT[v:v + 1, :]                   # (1, Bt)
        wp = w_andT[:, v:v + 1]               # (K, 1)  weight of literal x_v
        wn = w_andT[:, V + v:V + v + 1]       # (K, 1)  weight of literal (1 - x_v)
        terms.append((wp * xv + (1.0 - wp)) * (1.0 - wn * xv))   # (K, Bt)
    h = _tree_prod(terms)                     # (K, Bt)   h[k, b]

    # ---- OR layer: out[o,b] = 1 - prod_k ( 1 - w_or[k,o] * h[k,b] ) --------
    gated = [1.0 - w_orT[:, k:k + 1] * h[k:k + 1, :] for k in range(K)]   # K x (O, Bt)
    out_ref[...] = 1.0 - _tree_prod(gated)    # (O, Bt)


def gcln_dnf_arch1_forward(x, w_and, w_or, *, b_tile=None):
    """x: (B, n_vars) f32; w_and: (2*n_vars, K); w_or: (K, O).  Returns (B, O) f32."""
    B, V = x.shape
    I, K = w_and.shape
    K2, O = w_or.shape
    assert I == 2 * V, "layer_and_weights must have 2*n_vars rows (x and 1-x literals)"
    assert K == K2

    x = x.astype(jnp.float32)
    # Hoist the parameter clamp out of the kernel (PyTorch clamps in forward()).
    # Transposed so in-kernel column slices are natural lane slices.
    w_andT = jnp.clip(w_and.astype(jnp.float32), 0.0, 1.0).T      # (K, I)
    w_orT = jnp.clip(w_or.astype(jnp.float32), 0.0, 1.0).T        # (O, K)

    # Batch tiling: one large lane-dense tile per grid step.  Small batches run
    # in a single step; larger batches use >=2 tiles (multiples of 128 lanes) so
    # stores stay unmasked and both v7x TensorCores get work.  VMEM per step is
    # only a few hundred KB, far below the 32 MiB scoped default on all gens.
    if b_tile is None:
        if B >= 1024:
            b_tile = 512
        elif B >= 256:
            b_tile = 128
        else:
            b_tile = B
    b_tile = min(b_tile, B)
    if b_tile != B and b_tile % 128 != 0:
        b_tile = max(128, (b_tile // 128) * 128)
    b_pad = pl.cdiv(B, b_tile) * b_tile

    # Lane-dense layout: batch lives on the last (lane) dim of input and output.
    xT = x.T                                                      # (V, B)
    if b_pad != B:
        xT = jnp.pad(xT, ((0, 0), (0, b_pad - B)))                # ragged batch -> pad

    grid = (b_pad // b_tile,)
    outT = pl.pallas_call(
        gcln_dnf_kernel,
        out_shape=jax.ShapeDtypeStruct((O, b_pad), jnp.float32),
        grid_spec=pltpu.PrefetchScalarGridSpec(
            num_scalar_prefetch=0,
            grid=grid,
            in_specs=[
                pl.BlockSpec((V, b_tile), lambda b: (0, b)),      # x^T, tiled over batch
                pl.BlockSpec((K, I), lambda b: (0, 0)),           # AND weights^T, resident
                pl.BlockSpec((O, K), lambda b: (0, 0)),           # OR  weights^T, resident
            ],
            out_specs=pl.BlockSpec((O, b_tile), lambda b: (0, b)),
        ),
        compiler_params=pltpu.CompilerParams(
            dimension_semantics=("parallel",),
        ),
    )(xT, w_andT, w_orT)

    return outT.T[:B]                                             # (B, O)


def gcln_dnf_arch1_reference(x, w_and, w_or):
    """Pure-JAX reference mirroring the PyTorch forward (product t-norm, dim=-2)."""
    inputs = jnp.concatenate([x, 1.0 - x], axis=1)[:, :, None]    # (B, I, 1)
    wa = jnp.clip(w_and, 0.0, 1.0)                                # (I, K)
    wo = jnp.clip(w_or, 0.0, 1.0)                                 # (K, O)
    and_res = wa[None] * inputs + (1.0 - wa)[None]                # (B, I, K)
    h = jnp.prod(and_res, axis=-2)[:, :, None]                    # (B, K, 1)
    gated_and = wo[None] * h                                      # (B, K, O)
    return 1.0 - jnp.prod(1.0 - gated_and, axis=-2)               # (B, O)


if __name__ == "__main__":
    # GCLN_DNF_Arch1(input_size=8, num_of_output_var=4, K=32) only applies
    # cnf_layer_1 = DNF_Netowrk(input_size=8, output_size=1, hidden_size=32):
    #   x: (batch, n_vars=4) -> literals (x, 1-x): 8 -> hidden K=32 -> output 1.
    batch, n_vars, K = 8, 4, 32
    input_size = 2 * n_vars      # 8 literals
    out_size = 1                 # cnf_layer_1 output_size == 1

    key = jax.random.PRNGKey(0)
    kx, kw1, kw2 = jax.random.split(key, 3)
    x = jax.random.uniform(kx, (batch, n_vars), dtype=jnp.float32)
    # Parameter init mirrors .uniform_(0.0, 1.0); forward clamps to [0,1] anyway.
    w_and = jax.random.uniform(kw1, (input_size, K), dtype=jnp.float32)
    w_or = jax.random.uniform(kw2, (K, out_size), dtype=jnp.float32)

    out = jax.block_until_ready(gcln_dnf_arch1_forward(x, w_and, w_or))
    ref = gcln_dnf_arch1_reference(x, w_and, w_or)
    assert out.shape == (batch, out_size)
    assert jnp.allclose(out, ref, atol=1e-5, rtol=1e-5), "mismatch vs reference (small batch)"

    # Larger, ragged batch exercises the multi-tile (grid >= 2) padded path.
    x_big = jax.random.uniform(jax.random.PRNGKey(1), (300, n_vars), dtype=jnp.float32)
    out_big = jax.block_until_ready(gcln_dnf_arch1_forward(x_big, w_and, w_or))
    ref_big = gcln_dnf_arch1_reference(x_big, w_and, w_or)
    assert out_big.shape == (300, out_size)
    assert jnp.allclose(out_big, ref_big, atol=1e-5, rtol=1e-5), "mismatch vs reference (tiled batch)"

    print("KERNEL_OK")
</pallas_src>

<mosaic_0001>
module attributes {stable_mosaic.version = 11 : i64} {
  func.func @gcln_dnf_kernel(%arg0: i32, %arg1: memref<4x8xf32, #tpu.memory_space<vmem>>, %arg2: memref<32x8xf32, #tpu.memory_space<vmem>>, %arg3: memref<1x32xf32, #tpu.memory_space<vmem>>, %arg4: memref<1x8xf32, #tpu.memory_space<vmem>>) attributes {dimension_semantics = [#tpu.dimension_semantics<parallel>], iteration_bounds = array<i64: 1>, scalar_prefetch = 0 : i64, scratch_operands = 0 : i64, tpu.core_type = #tpu.core_type<tc>, window_params = [{transform_indices = @transform_0, window_bounds = array<i64: 4, 8>}, {pipeline_mode = #tpu.pipeline_mode<synchronous>, transform_indices = @transform_1, window_bounds = array<i64: 32, 8>}, {pipeline_mode = #tpu.pipeline_mode<synchronous>, transform_indices = @transform_2, window_bounds = array<i64: 1, 32>}, {transform_indices = @transform_3, window_bounds = array<i64: 1, 8>}]} {
    %c0 = arith.constant 0 : index
    %c0_0 = arith.constant 0 : index
    %0 = vector.load %arg1[%c0, %c0_0] : memref<4x8xf32, #tpu.memory_space<vmem>>, vector<4x8xf32>
    %c0_1 = arith.constant 0 : index
    %c0_2 = arith.constant 0 : index
    %1 = vector.load %arg2[%c0_1, %c0_2] : memref<32x8xf32, #tpu.memory_space<vmem>>, vector<32x8xf32>
    %c0_3 = arith.constant 0 : index
    %c0_4 = arith.constant 0 : index
    %2 = vector.load %arg3[%c0_3, %c0_4] : memref<1x32xf32, #tpu.memory_space<vmem>>, vector<1x32xf32>
    %3 = vector.extract_strided_slice %0 {offsets = [0, 0], sizes = [1, 8], strides = [1, 1]} : vector<4x8xf32> to vector<1x8xf32>
    %4 = vector.extract_strided_slice %1 {offsets = [0, 0], sizes = [32, 1], strides = [1, 1]} : vector<32x8xf32> to vector<32x1xf32>
    %5 = vector.extract_strided_slice %1 {offsets = [0, 4], sizes = [32, 1], strides = [1, 1]} : vector<32x8xf32> to vector<32x1xf32>
    %6 = vector.broadcast %4 : vector<32x1xf32> to vector<32x8xf32>
    %7 = vector.broadcast %3 : vector<1x8xf32> to vector<32x8xf32>
    %8 = arith.mulf %6, %7 : vector<32x8xf32>
    %cst = arith.constant 1.000000e+00 : f32
    %9 = vector.broadcast %cst : f32 to vector<32x1xf32>
    %10 = arith.subf %9, %4 : vector<32x1xf32>
    %11 = vector.broadcast %10 : vector<32x1xf32> to vector<32x8xf32>
    %12 = arith.addf %8, %11 : vector<32x8xf32>
    %13 = vector.broadcast %5 : vector<32x1xf32> to vector<32x8xf32>
    %14 = vector.broadcast %3 : vector<1x8xf32> to vector<32x8xf32>
    %15 = arith.mulf %13, %14 : vector<32x8xf32>
    %cst_5 = arith.constant 1.000000e+00 : f32
    %16 = vector.broadcast %cst_5 : f32 to vector<32x8xf32>
    %17 = arith.subf %16, %15 : vector<32x8xf32>
    %18 = arith.mulf %12, %17 : vector<32x8xf32>
    %19 = vector.extract_strided_slice %0 {offsets = [1, 0], sizes = [1, 8], strides = [1, 1]} : vector<4x8xf32> to vector<1x8xf32>
    %20 = vector.extract_strided_slice %1 {offsets = [0, 1], sizes = [32, 1], strides = [1, 1]} : vector<32x8xf32> to vector<32x1xf32>
    %21 = vector.extract_strided_slice %1 {offsets = [0, 5], sizes = [32, 1], strides = [1, 1]} : vector<32x8xf32> to vector<32x1xf32>
    %22 = vector.broadcast %20 : vector<32x1xf32> to vector<32x8xf32>
    %23 = vector.broadcast %19 : vector<1x8xf32> to vector<32x8xf32>
    %24 = arith.mulf %22, %23 : vector<32x8xf32>
    %cst_6 = arith.constant 1.000000e+00 : f32
    %25 = vector.broadcast %cst_6 : f32 to vector<32x1xf32>
    %26 = arith.subf %25, %20 : vector<32x1xf32>
    %27 = vector.broadcast %26 : vector<32x1xf32> to vector<32x8xf32>
    %28 = arith.addf %24, %27 : vector<32x8xf32>
    %29 = vector.broadcast %21 : vector<32x1xf32> to vector<32x8xf32>
    %30 = vector.broadcast %19 : vector<1x8xf32> to vector<32x8xf32>
    %31 = arith.mulf %29, %30 : vector<32x8xf32>
    %cst_7 = arith.constant 1.000000e+00 : f32
    %32 = vector.broadcast %cst_7 : f32 to vector<32x8xf32>
    %33 = arith.subf %32, %31 : vector<32x8xf32>
    %34 = arith.mulf %28, %33 : vector<32x8xf32>
    %35 = vector.extract_strided_slice %0 {offsets = [2, 0], sizes = [1, 8], strides = [1, 1]} : vector<4x8xf32> to vector<1x8xf32>
    %36 = vector.extract_strided_slice %1 {offsets = [0, 2], sizes = [32, 1], strides = [1, 1]} : vector<32x8xf32> to vector<32x1xf32>
    %37 = vector.extract_strided_slice %1 {offsets = [0, 6], sizes = [32, 1], strides = [1, 1]} : vector<32x8xf32> to vector<32x1xf32>
    %38 = vector.broadcast %36 : vector<32x1xf32> to vector<32x8xf32>
    %39 = vector.broadcast %35 : vector<1x8xf32> to vector<32x8xf32>
    %40 = arith.mulf %38, %39 : vector<32x8xf32>
    %cst_8 = arith.constant 1.000000e+00 : f32
    %41 = vector.broadcast %cst_8 : f32 to vector<32x1xf32>
    %42 = arith.subf %41, %36 : vector<32x1xf32>
    %43 = vector.broadcast %42 : vector<32x1xf32> to vector<32x8xf32>
    %44 = arith.addf %40, %43 : vector<32x8xf32>
    %45 = vector.broadcast %37 : vector<32x1xf32> to vector<32x8xf32>
    %46 = vector.broadcast %35 : vector<1x8xf32> to vector<32x8xf32>
    %47 = arith.mulf %45, %46 : vector<32x8xf32>
    %cst_9 = arith.constant 1.000000e+00 : f32
    %48 = vector.broadcast %cst_9 : f32 to vector<32x8xf32>
    %49 = arith.subf %48, %47 : vector<32x8xf32>
    %50 = arith.mulf %44, %49 : vector<32x8xf32>
    %51 = vector.extract_strided_slice %0 {offsets = [3, 0], sizes = [1, 8], strides = [1, 1]} : vector<4x8xf32> to vector<1x8xf32>
    %52 = vector.extract_strided_slice %1 {offsets = [0, 3], sizes = [32, 1], strides = [1, 1]} : vector<32x8xf32> to vector<32x1xf32>
    %53 = vector.extract_strided_slice %1 {offsets = [0, 7], sizes = [32, 1], strides = [1, 1]} : vector<32x8xf32> to vector<32x1xf32>
    %54 = vector.broadcast %52 : vector<32x1xf32> to vector<32x8xf32>
    %55 = vector.broadcast %51 : vector<1x8xf32> to vector<32x8xf32>
    %56 = arith.mulf %54, %55 : vector<32x8xf32>
    %cst_10 = arith.constant 1.000000e+00 : f32
    %57 = vector.broadcast %cst_10 : f32 to vector<32x1xf32>
    %58 = arith.subf %57, %52 : vector<32x1xf32>
    %59 = vector.broadcast %58 : vector<32x1xf32> to vector<32x8xf32>
    %60 = arith.addf %56, %59 : vector<32x8xf32>
    %61 = vector.broadcast %53 : vector<32x1xf32> to vector<32x8xf32>
    %62 = vector.broadcast %51 : vector<1x8xf32> to vector<32x8xf32>
    %63 = arith.mulf %61, %62 : vector<32x8xf32>
    %cst_11 = arith.constant 1.000000e+00 : f32
    %64 = vector.broadcast %cst_11 : f32 to vector<32x8xf32>
    %65 = arith.subf %64, %63 : vector<32x8xf32>
    %66 = arith.mulf %60, %65 : vector<32x8xf32>
    %67 = arith.mulf %18, %34 : vector<32x8xf32>
    %68 = arith.mulf %50, %66 : vector<32x8xf32>
    %69 = arith.mulf %67, %68 : vector<32x8xf32>
    %70 = vector.extract_strided_slice %2 {offsets = [0, 0], sizes = [1, 1], strides = [1, 1]} : vector<1x32xf32> to vector<1x1xf32>
    %71 = vector.extract_strided_slice %69 {offsets = [0, 0], sizes = [1, 8], strides = [1, 1]} : vector<32x8xf32> to vector<1x8xf32>
    %72 = vector.broadcast %70 : vector<1x1xf32> to vector<1x8xf32>
    %73 = arith.mulf %72, %71 : vector<1x8xf32>
    %cst_12 = arith.constant 1.000000e+00 : f32
    %74 = vector.broadcast %cst_12 : f32 to vector<1x8xf32>
    %75 = arith.subf %74, %73 : vector<1x8xf32>
    %76 = vector.extract_strided_slice %2 {offsets = [0, 1], sizes = [1, 1], strides = [1, 1]} : vector<1x32xf32> to vector<1x1xf32>
    %77 = vector.extract_strided_slice %69 {offsets = [1, 0], sizes = [1, 8], strides = [1, 1]} : vector<32x8xf32> to vector<1x8xf32>
    %78 = vector.broadcast %76 : vector<1x1xf32> to vector<1x8xf32>
    %79 = arith.mulf %78, %77 : vector<1x8xf32>
    %cst_13 = arith.constant 1.000000e+00 : f32
    %80 = vector.broadcast %cst_13 : f32 to vector<1x8xf32>
    %81 = arith.subf %80, %79 : vector<1x8xf32>
    %82 = vector.extract_strided_slice %2 {offsets = [0, 2], sizes = [1, 1], strides = [1, 1]} : vector<1x32xf32> to vector<1x1xf32>
    %83 = vector.extract_strided_slice %69 {offsets = [2, 0], sizes = [1, 8], strides = [1, 1]} : vector<32x8xf32> to vector<1x8xf32>
    %84 = vector.broadcast %82 : vector<1x1xf32> to vector<1x8xf32>
    %85 = arith.mulf %84, %83 : vector<1x8xf32>
    %cst_14 = arith.constant 1.000000e+00 : f32
    %86 = vector.broadcast %cst_14 : f32 to vector<1x8xf32>
    %87 = arith.subf %86, %85 : vector<1x8xf32>
    %88 = vector.extract_strided_slice %2 {offsets = [0, 3], sizes = [1, 1], strides = [1, 1]} : vector<1x32xf32> to vector<1x1xf32>
    %89 = vector.extract_strided_slice %69 {offsets = [3, 0], sizes = [1, 8], strides = [1, 1]} : vector<32x8xf32> to vector<1x8xf32>
    %90 = vector.broadcast %88 : vector<1x1xf32> to vector<1x8xf32>
    %91 = arith.mulf %90, %89 : vector<1x8xf32>
    %cst_15 = arith.constant 1.000000e+00 : f32
    %92 = vector.broadcast %cst_15 : f32 to vector<1x8xf32>
    %93 = arith.subf %92, %91 : vector<1x8xf32>
    %94 = vector.extract_strided_slice %2 {offsets = [0, 4], sizes = [1, 1], strides = [1, 1]} : vector<1x32xf32> to vector<1x1xf32>
    %95 = vector.extract_strided_slice %69 {offsets = [4, 0], sizes = [1, 8], strides = [1, 1]} : vector<32x8xf32> to vector<1x8xf32>
    %96 = vector.broadcast %94 : vector<1x1xf32> to vector<1x8xf32>
    %97 = arith.mulf %96, %95 : vector<1x8xf32>
    %cst_16 = arith.constant 1.000000e+00 : f32
    %98 = vector.broadcast %cst_16 : f32 to vector<1x8xf32>
    %99 = arith.subf %98, %97 : vector<1x8xf32>
    %100 = vector.extract_strided_slice %2 {offsets = [0, 5], sizes = [1, 1], strides = [1, 1]} : vector<1x32xf32> to vector<1x1xf32>
    %101 = vector.extract_strided_slice %69 {offsets = [5, 0], sizes = [1, 8], strides = [1, 1]} : vector<32x8xf32> to vector<1x8xf32>
    %102 = vector.broadcast %100 : vector<1x1xf32> to vector<1x8xf32>
    %103 = arith.mulf %102, %101 : vector<1x8xf32>
    %cst_17 = arith.constant 1.000000e+00 : f32
    %104 = vector.broadcast %cst_17 : f32 to vector<1x8xf32>
    %105 = arith.subf %104, %103 : vector<1x8xf32>
    %106 = vector.extract_strided_slice %2 {offsets = [0, 6], sizes = [1, 1], strides = [1, 1]} : vector<1x32xf32> to vector<1x1xf32>
    %107 = vector.extract_strided_slice %69 {offsets = [6, 0], sizes = [1, 8], strides = [1, 1]} : vector<32x8xf32> to vector<1x8xf32>
    %108 = vector.broadcast %106 : vector<1x1xf32> to vector<1x8xf32>
    %109 = arith.mulf %108, %107 : vector<1x8xf32>
    %cst_18 = arith.constant 1.000000e+00 : f32
    %110 = vector.broadcast %cst_18 : f32 to vector<1x8xf32>
    %111 = arith.subf %110, %109 : vector<1x8xf32>
    %112 = vector.extract_strided_slice %2 {offsets = [0, 7], sizes = [1, 1], strides = [1, 1]} : vector<1x32xf32> to vector<1x1xf32>
    %113 = vector.extract_strided_slice %69 {offsets = [7, 0], sizes = [1, 8], strides = [1, 1]} : vector<32x8xf32> to vector<1x8xf32>
    %114 = vector.broadcast %112 : vector<1x1xf32> to vector<1x8xf32>
    %115 = arith.mulf %114, %113 : vector<1x8xf32>
    %cst_19 = arith.constant 1.000000e+00 : f32
    %116 = vector.broadcast %cst_19 : f32 to vector<1x8xf32>
    %117 = arith.subf %116, %115 : vector<1x8xf32>
    %118 = vector.extract_strided_slice %2 {offsets = [0, 8], sizes = [1, 1], strides = [1, 1]} : vector<1x32xf32> to vector<1x1xf32>
    %119 = vector.extract_strided_slice %69 {offsets = [8, 0], sizes = [1, 8], strides = [1, 1]} : vector<32x8xf32> to vector<1x8xf32>
    %120 = vector.broadcast %118 : vector<1x1xf32> to vector<1x8xf32>
    %121 = arith.mulf %120, %119 : vector<1x8xf32>
    %cst_20 = arith.constant 1.000000e+00 : f32
    %122 = vector.broadcast %cst_20 : f32 to vector<1x8xf32>
    %123 = arith.subf %122, %121 : vector<1x8xf32>
    %124 = vector.extract_strided_slice %2 {offsets = [0, 9], sizes = [1, 1], strides = [1, 1]} : vector<1x32xf32> to vector<1x1xf32>
    %125 = vector.extract_strided_slice %69 {offsets = [9, 0], sizes = [1, 8], strides = [1, 1]} : vector<32x8xf32> to vector<1x8xf32>
    %126 = vector.broadcast %124 : vector<1x1xf32> to vector<1x8xf32>
    %127 = arith.mulf %126, %125 : vector<1x8xf32>
    %cst_21 = arith.constant 1.000000e+00 : f32
    %128 = vector.broadcast %cst_21 : f32 to vector<1x8xf32>
    %129 = arith.subf %128, %127 : vector<1x8xf32>
    %130 = vector.extract_strided_slice %2 {offsets = [0, 10], sizes = [1, 1], strides = [1, 1]} : vector<1x32xf32> to vector<1x1xf32>
    %131 = vector.extract_strided_slice %69 {offsets = [10, 0], sizes = [1, 8], strides = [1, 1]} : vector<32x8xf32> to vector<1x8xf32>
    %132 = vector.broadcast %130 : vector<1x1xf32> to vector<1x8xf32>
    %133 = arith.mulf %132, %131 : vector<1x8xf32>
    %cst_22 = arith.constant 1.000000e+00 : f32
    %134 = vector.broadcast %cst_22 : f32 to vector<1x8xf32>
    %135 = arith.subf %134, %133 : vector<1x8xf32>
    %136 = vector.extract_strided_slice %2 {offsets = [0, 11], sizes = [1, 1], strides = [1, 1]} : vector<1x32xf32> to vector<1x1xf32>
    %137 = vector.extract_strided_slice %69 {offsets = [11, 0], sizes = [1, 8], strides = [1, 1]} : vector<32x8xf32> to vector<1x8xf32>
    %138 = vector.broadcast %136 : vector<1x1xf32> to vector<1x8xf32>
    %139 = arith.mulf %138, %137 : vector<1x8xf32>
    %cst_23 = arith.constant 1.000000e+00 : f32
    %140 = vector.broadcast %cst_23 : f32 to vector<1x8xf32>
    %141 = arith.subf %140, %139 : vector<1x8xf32>
    %142 = vector.extract_strided_slice %2 {offsets = [0, 12], sizes = [1, 1], strides = [1, 1]} : vector<1x32xf32> to vector<1x1xf32>
    %143 = vector.extract_strided_slice %69 {offsets = [12, 0], sizes = [1, 8], strides = [1, 1]} : vector<32x8xf32> to vector<1x8xf32>
    %144 = vector.broadcast %142 : vector<1x1xf32> to vector<1x8xf32>
    %145 = arith.mulf %144, %143 : vector<1x8xf32>
    %cst_24 = arith.constant 1.000000e+00 : f32
    %146 = vector.broadcast %cst_24 : f32 to vector<1x8xf32>
    %147 = arith.subf %146, %145 : vector<1x8xf32>
    %148 = vector.extract_strided_slice %2 {offsets = [0, 13], sizes = [1, 1], strides = [1, 1]} : vector<1x32xf32> to vector<1x1xf32>
    %149 = vector.extract_strided_slice %69 {offsets = [13, 0], sizes = [1, 8], strides = [1, 1]} : vector<32x8xf32> to vector<1x8xf32>
    %150 = vector.broadcast %148 : vector<1x1xf32> to vector<1x8xf32>
    %151 = arith.mulf %150, %149 : vector<1x8xf32>
    %cst_25 = arith.constant 1.000000e+00 : f32
    %152 = vector.broadcast %cst_25 : f32 to vector<1x8xf32>
    %153 = arith.subf %152, %151 : vector<1x8xf32>
    %154 = vector.extract_strided_slice %2 {offsets = [0, 14], sizes = [1, 1], strides = [1, 1]} : vector<1x32xf32> to vector<1x1xf32>
    %155 = vector.extract_strided_slice %69 {offsets = [14, 0], sizes = [1, 8], strides = [1, 1]} : vector<32x8xf32> to vector<1x8xf32>
    %156 = vector.broadcast %154 : vector<1x1xf32> to vector<1x8xf32>
    %157 = arith.mulf %156, %155 : vector<1x8xf32>
    %cst_26 = arith.constant 1.000000e+00 : f32
    %158 = vector.broadcast %cst_26 : f32 to vector<1x8xf32>
    %159 = arith.subf %158, %157 : vector<1x8xf32>
    %160 = vector.extract_strided_slice %2 {offsets = [0, 15], sizes = [1, 1], strides = [1, 1]} : vector<1x32xf32> to vector<1x1xf32>
    %161 = vector.extract_strided_slice %69 {offsets = [15, 0], sizes = [1, 8], strides = [1, 1]} : vector<32x8xf32> to vector<1x8xf32>
    %162 = vector.broadcast %160 : vector<1x1xf32> to vector<1x8xf32>
    %163 = arith.mulf %162, %161 : vector<1x8xf32>
    %cst_27 = arith.constant 1.000000e+00 : f32
    %164 = vector.broadcast %cst_27 : f32 to vector<1x8xf32>
    %165 = arith.subf %164, %163 : vector<1x8xf32>
    %166 = vector.extract_strided_slice %2 {offsets = [0, 16], sizes = [1, 1], strides = [1, 1]} : vector<1x32xf32> to vector<1x1xf32>
    %167 = vector.extract_strided_slice %69 {offsets = [16, 0], sizes = [1, 8], strides = [1, 1]} : vector<32x8xf32> to vector<1x8xf32>
    %168 = vector.broadcast %166 : vector<1x1xf32> to vector<1x8xf32>
    %169 = arith.mulf %168, %167 : vector<1x8xf32>
    %cst_28 = arith.constant 1.000000e+00 : f32
    %170 = vector.broadcast %cst_28 : f32 to vector<1x8xf32>
    %171 = arith.subf %170, %169 : vector<1x8xf32>
    %172 = vector.extract_strided_slice %2 {offsets = [0, 17], sizes = [1, 1], strides = [1, 1]} : vector<1x32xf32> to vector<1x1xf32>
    %173 = vector.extract_strided_slice %69 {offsets = [17, 0], sizes = [1, 8], strides = [1, 1]} : vector<32x8xf32> to vector<1x8xf32>
    %174 = vector.broadcast %172 : vector<1x1xf32> to vector<1x8xf32>
    %175 = arith.mulf %174, %173 : vector<1x8xf32>
    %cst_29 = arith.constant 1.000000e+00 : f32
    %176 = vector.broadcast %cst_29 : f32 to vector<1x8xf32>
    %177 = arith.subf %176, %175 : vector<1x8xf32>
    %178 = vector.extract_strided_slice %2 {offsets = [0, 18], sizes = [1, 1], strides = [1, 1]} : vector<1x32xf32> to vector<1x1xf32>
    %179 = vector.extract_strided_slice %69 {offsets = [18, 0], sizes = [1, 8], strides = [1, 1]} : vector<32x8xf32> to vector<1x8xf32>
    %180 = vector.broadcast %178 : vector<1x1xf32> to vector<1x8xf32>
    %181 = arith.mulf %180, %179 : vector<1x8xf32>
    %cst_30 = arith.constant 1.000000e+00 : f32
    %182 = vector.broadcast %cst_30 : f32 to vector<1x8xf32>
    %183 = arith.subf %182, %181 : vector<1x8xf32>
    %184 = vector.extract_strided_slice %2 {offsets = [0, 19], sizes = [1, 1], strides = [1, 1]} : vector<1x32xf32> to vector<1x1xf32>
    %185 = vector.extract_strided_slice %69 {offsets = [19, 0], sizes = [1, 8], strides = [1, 1]} : vector<32x8xf32> to vector<1x8xf32>
    %186 = vector.broadcast %184 : vector<1x1xf32> to vector<1x8xf32>
    %187 = arith.mulf %186, %185 : vector<1x8xf32>
    %cst_31 = arith.constant 1.000000e+00 : f32
    %188 = vector.broadcast %cst_31 : f32 to vector<1x8xf32>
    %189 = arith.subf %188, %187 : vector<1x8xf32>
    %190 = vector.extract_strided_slice %2 {offsets = [0, 20], sizes = [1, 1], strides = [1, 1]} : vector<1x32xf32> to vector<1x1xf32>
    %191 = vector.extract_strided_slice %69 {offsets = [20, 0], sizes = [1, 8], strides = [1, 1]} : vector<32x8xf32> to vector<1x8xf32>
    %192 = vector.broadcast %190 : vector<1x1xf32> to vector<1x8xf32>
    %193 = arith.mulf %192, %191 : vector<1x8xf32>
    %cst_32 = arith.constant 1.000000e+00 : f32
    %194 = vector.broadcast %cst_32 : f32 to vector<1x8xf32>
    %195 = arith.subf %194, %193 : vector<1x8xf32>
    %196 = vector.extract_strided_slice %2 {offsets = [0, 21], sizes = [1, 1], strides = [1, 1]} : vector<1x32xf32> to vector<1x1xf32>
    %197 = vector.extract_strided_slice %69 {offsets = [21, 0], sizes = [1, 8], strides = [1, 1]} : vector<32x8xf32> to vector<1x8xf32>
    %198 = vector.broadcast %196 : vector<1x1xf32> to vector<1x8xf32>
    %199 = arith.mulf %198, %197 : vector<1x8xf32>
    %cst_33 = arith.constant 1.000000e+00 : f32
    %200 = vector.broadcast %cst_33 : f32 to vector<1x8xf32>
    %201 = arith.subf %200, %199 : vector<1x8xf32>
    %202 = vector.extract_strided_slice %2 {offsets = [0, 22], sizes = [1, 1], strides = [1, 1]} : vector<1x32xf32> to vector<1x1xf32>
    %203 = vector.extract_strided_slice %69 {offsets = [22, 0], sizes = [1, 8], strides = [1, 1]} : vector<32x8xf32> to vector<1x8xf32>
    %204 = vector.broadcast %202 : vector<1x1xf32> to vector<1x8xf32>
    %205 = arith.mulf %204, %203 : vector<1x8xf32>
    %cst_34 = arith.constant 1.000000e+00 : f32
    %206 = vector.broadcast %cst_34 : f32 to vector<1x8xf32>
    %207 = arith.subf %206, %205 : vector<1x8xf32>
    %208 = vector.extract_strided_slice %2 {offsets = [0, 23], sizes = [1, 1], strides = [1, 1]} : vector<1x32xf32> to vector<1x1xf32>
    %209 = vector.extract_strided_slice %69 {offsets = [23, 0], sizes = [1, 8], strides = [1, 1]} : vector<32x8xf32> to vector<1x8xf32>
    %210 = vector.broadcast %208 : vector<1x1xf32> to vector<1x8xf32>
    %211 = arith.mulf %210, %209 : vector<1x8xf32>
    %cst_35 = arith.constant 1.000000e+00 : f32
    %212 = vector.broadcast %cst_35 : f32 to vector<1x8xf32>
    %213 = arith.subf %212, %211 : vector<1x8xf32>
    %214 = vector.extract_strided_slice %2 {offsets = [0, 24], sizes = [1, 1], strides = [1, 1]} : vector<1x32xf32> to vector<1x1xf32>
    %215 = vector.extract_strided_slice %69 {offsets = [24, 0], sizes = [1, 8], strides = [1, 1]} : vector<32x8xf32> to vector<1x8xf32>
    %216 = vector.broadcast %214 : vector<1x1xf32> to vector<1x8xf32>
    %217 = arith.mulf %216, %215 : vector<1x8xf32>
    %cst_36 = arith.constant 1.000000e+00 : f32
    %218 = vector.broadcast %cst_36 : f32 to vector<1x8xf32>
    %219 = arith.subf %218, %217 : vector<1x8xf32>
    %220 = vector.extract_strided_slice %2 {offsets = [0, 25], sizes = [1, 1], strides = [1, 1]} : vector<1x32xf32> to vector<1x1xf32>
    %221 = vector.extract_strided_slice %69 {offsets = [25, 0], sizes = [1, 8], strides = [1, 1]} : vector<32x8xf32> to vector<1x8xf32>
    %222 = vector.broadcast %220 : vector<1x1xf32> to vector<1x8xf32>
    %223 = arith.mulf %222, %221 : vector<1x8xf32>
    %cst_37 = arith.constant 1.000000e+00 : f32
    %224 = vector.broadcast %cst_37 : f32 to vector<1x8xf32>
    %225 = arith.subf %224, %223 : vector<1x8xf32>
    %226 = vector.extract_strided_slice %2 {offsets = [0, 26], sizes = [1, 1], strides = [1, 1]} : vector<1x32xf32> to vector<1x1xf32>
    %227 = vector.extract_strided_slice %69 {offsets = [26, 0], sizes = [1, 8], strides = [1, 1]} : vector<32x8xf32> to vector<1x8xf32>
    %228 = vector.broadcast %226 : vector<1x1xf32> to vector<1x8xf32>
    %229 = arith.mulf %228, %227 : vector<1x8xf32>
    %cst_38 = arith.constant 1.000000e+00 : f32
    %230 = vector.broadcast %cst_38 : f32 to vector<1x8xf32>
    %231 = arith.subf %230, %229 : vector<1x8xf32>
    %232 = vector.extract_strided_slice %2 {offsets = [0, 27], sizes = [1, 1], strides = [1, 1]} : vector<1x32xf32> to vector<1x1xf32>
    %233 = vector.extract_strided_slice %69 {offsets = [27, 0], sizes = [1, 8], strides = [1, 1]} : vector<32x8xf32> to vector<1x8xf32>
    %234 = vector.broadcast %232 : vector<1x1xf32> to vector<1x8xf32>
    %235 = arith.mulf %234, %233 : vector<1x8xf32>
    %cst_39 = arith.constant 1.000000e+00 : f32
    %236 = vector.broadcast %cst_39 : f32 to vector<1x8xf32>
    %237 = arith.subf %236, %235 : vector<1x8xf32>
    %238 = vector.extract_strided_slice %2 {offsets = [0, 28], sizes = [1, 1], strides = [1, 1]} : vector<1x32xf32> to vector<1x1xf32>
    %239 = vector.extract_strided_slice %69 {offsets = [28, 0], sizes = [1, 8], strides = [1, 1]} : vector<32x8xf32> to vector<1x8xf32>
    %240 = vector.broadcast %238 : vector<1x1xf32> to vector<1x8xf32>
    %241 = arith.mulf %240, %239 : vector<1x8xf32>
    %cst_40 = arith.constant 1.000000e+00 : f32
    %242 = vector.broadcast %cst_40 : f32 to vector<1x8xf32>
    %243 = arith.subf %242, %241 : vector<1x8xf32>
    %244 = vector.extract_strided_slice %2 {offsets = [0, 29], sizes = [1, 1], strides = [1, 1]} : vector<1x32xf32> to vector<1x1xf32>
    %245 = vector.extract_strided_slice %69 {offsets = [29, 0], sizes = [1, 8], strides = [1, 1]} : vector<32x8xf32> to vector<1x8xf32>
    %246 = vector.broadcast %244 : vector<1x1xf32> to vector<1x8xf32>
    %247 = arith.mulf %246, %245 : vector<1x8xf32>
    %cst_41 = arith.constant 1.000000e+00 : f32
    %248 = vector.broadcast %cst_41 : f32 to vector<1x8xf32>
    %249 = arith.subf %248, %247 : vector<1x8xf32>
    %250 = vector.extract_strided_slice %2 {offsets = [0, 30], sizes = [1, 1], strides = [1, 1]} : vector<1x32xf32> to vector<1x1xf32>
    %251 = vector.extract_strided_slice %69 {offsets = [30, 0], sizes = [1, 8], strides = [1, 1]} : vector<32x8xf32> to vector<1x8xf32>
    %252 = vector.broadcast %250 : vector<1x1xf32> to vector<1x8xf32>
    %253 = arith.mulf %252, %251 : vector<1x8xf32>
    %cst_42 = arith.constant 1.000000e+00 : f32
    %254 = vector.broadcast %cst_42 : f32 to vector<1x8xf32>
    %255 = arith.subf %254, %253 : vector<1x8xf32>
    %256 = vector.extract_strided_slice %2 {offsets = [0, 31], sizes = [1, 1], strides = [1, 1]} : vector<1x32xf32> to vector<1x1xf32>
    %257 = vector.extract_strided_slice %69 {offsets = [31, 0], sizes = [1, 8], strides = [1, 1]} : vector<32x8xf32> to vector<1x8xf32>
    %258 = vector.broadcast %256 : vector<1x1xf32> to vector<1x8xf32>
    %259 = arith.mulf %258, %257 : vector<1x8xf32>
    %cst_43 = arith.constant 1.000000e+00 : f32
    %260 = vector.broadcast %cst_43 : f32 to vector<1x8xf32>
    %261 = arith.subf %260, %259 : vector<1x8xf32>
    %262 = arith.mulf %75, %81 : vector<1x8xf32>
    %263 = arith.mulf %87, %93 : vector<1x8xf32>
    %264 = arith.mulf %99, %105 : vector<1x8xf32>
    %265 = arith.mulf %111, %117 : vector<1x8xf32>
    %266 = arith.mulf %123, %129 : vector<1x8xf32>
    %267 = arith.mulf %135, %141 : vector<1x8xf32>
    %268 = arith.mulf %147, %153 : vector<1x8xf32>
    %269 = arith.mulf %159, %165 : vector<1x8xf32>
    %270 = arith.mulf %171, %177 : vector<1x8xf32>
    %271 = arith.mulf %183, %189 : vector<1x8xf32>
    %272 = arith.mulf %195, %201 : vector<1x8xf32>
    %273 = arith.mulf %207, %213 : vector<1x8xf32>
    %274 = arith.mulf %219, %225 : vector<1x8xf32>
    %275 = arith.mulf %231, %237 : vector<1x8xf32>
    %276 = arith.mulf %243, %249 : vector<1x8xf32>
    %277 = arith.mulf %255, %261 : vector<1x8xf32>
    %278 = arith.mulf %262, %263 : vector<1x8xf32>
    %279 = arith.mulf %264, %265 : vector<1x8xf32>
    %280 = arith.mulf %266, %267 : vector<1x8xf32>
    %281 = arith.mulf %268, %269 : vector<1x8xf32>
    %282 = arith.mulf %270, %271 : vector<1x8xf32>
    %283 = arith.mulf %272, %273 : vector<1x8xf32>
    %284 = arith.mulf %274, %275 : vector<1x8xf32>
    %285 = arith.mulf %276, %277 : vector<1x8xf32>
    %286 = arith.mulf %278, %279 : vector<1x8xf32>
    %287 = arith.mulf %280, %281 : vector<1x8xf32>
    %288 = arith.mulf %282, %283 : vector<1x8xf32>
    %289 = arith.mulf %284, %285 : vector<1x8xf32>
    %290 = arith.mulf %286, %287 : vector<1x8xf32>
    %291 = arith.mulf %288, %289 : vector<1x8xf32>
    %292 = arith.mulf %290, %291 : vector<1x8xf32>
    %cst_44 = arith.constant 1.000000e+00 : f32
    %293 = vector.broadcast %cst_44 : f32 to vector<1x8xf32>
    %294 = arith.subf %293, %292 : vector<1x8xf32>
    %c0_45 = arith.constant 0 : index
    %c0_46 = arith.constant 0 : index
    %295 = vector.load %arg4[%c0_45, %c0_46] : memref<1x8xf32, #tpu.memory_space<vmem>>, vector<1x8xf32>
    tpu.vector_store %arg4[%c0_45, %c0_46], %294 {strides = array<i32>} : memref<1x8xf32, #tpu.memory_space<vmem>>, vector<1x8xf32>,
    return
  }
  func.func @transform_0(%arg0: i32) -> (i32, i32) {
    %c0_i32 = arith.constant 0 : i32
    %c0_i32_0 = arith.constant 0 : i32
    return %c0_i32, %arg0 : i32, i32
  }
  func.func @transform_1(%arg0: i32) -> (i32, i32) {
    %c0_i32 = arith.constant 0 : i32
    %c0_i32_0 = arith.constant 0 : i32
    %c0_i32_1 = arith.constant 0 : i32
    return %c0_i32, %c0_i32_0 : i32, i32
  }
  func.func @transform_2(%arg0: i32) -> (i32, i32) {
    %c0_i32 = arith.constant 0 : i32
    %c0_i32_0 = arith.constant 0 : i32
    %c0_i32_1 = arith.constant 0 : i32
    return %c0_i32, %c0_i32_0 : i32, i32
  }
  func.func @transform_3(%arg0: i32) -> (i32, i32) {
    %c0_i32 = arith.constant 0 : i32
    %c0_i32_0 = arith.constant 0 : i32
    return %c0_i32, %arg0 : i32, i32
  }
}

</mosaic_0001>

<llo_original>
// kernel: tpu_custom_call.1
$region0: #{tpu_custom_call.1}
  #allocation0 [shape = 'u32[]', space=smem, size = 0x4, offset = 0x4, fixed_abs, tag = 'smem constant byte address 0x4 - core index']
  #allocation1 [shape = 'u32[72,128]{1,0:T(1,128)}', space=vmem, size = 0x9000, scoped, tag = 'internal scratch']
  %s0 = inlined_call_operand.vmem [shape: f32[4,8], index: 0, kind: input, shape index: {}]
  %s1 = inlined_call_operand.vmem [shape: f32[32,8], index: 1, kind: input, shape index: {}]
  %s2 = inlined_call_operand.vmem [shape: f32[1,32], index: 2, kind: input, shape index: {}]
  %s3 = inlined_call_operand.hbm [shape: f32[1,8], index: 3, kind: output, shape index: {}]
  %s4 = sld [smem:[#allocation0]]
  $region22: #{tpu_custom_call.1} parent=0
    _
  %s6 = ssub.s32 1, %s4
  %s7 = scalar_select 0, %s6, %s4
  $region1: #{tpu_custom_call.1} parent=0
    #allocation2 [shape = 'u8[512]{0}', space=vmem, size = 0x400, scoped, tag = 'output window, operand 0, single buffered']
    #allocation3 [shape = 's32[1]{0}', space=sflag, size = 0x4, scoped, tag = 'scoped memory for tpu_custom_call.1']
    %8 = vsyncpa [#allocation3], 0
    // Predicated region
    $region2: #{tpu_custom_call.1} parent=1 // pred_check
      _
    $region3: #{tpu_custom_call.1} parent=1 // pred_check_branch
      %10 = sbr.rel (0) target = $region5
    $region4: #{tpu_custom_call.1} parent=1 // pred_region
      _
    $region5: #{tpu_custom_call.1} parent=1 // pred_fallthru
      _
    // Predicated region
    $region6: #{tpu_custom_call.1} parent=1 // pred_check
      _
    $region7: #{tpu_custom_call.1} parent=1 // pred_check_branch
      %12 = sbr.rel (0) target = $region9
    $region8: #{tpu_custom_call.1} parent=1 // pred_region
      _
    $region9: #{tpu_custom_call.1} parent=1 // pred_fallthru
      _
    // Predicated region
    $region10: #{tpu_custom_call.1} parent=1 // pred_check
      _
    $region11: #{tpu_custom_call.1} parent=1 // pred_check_branch
      %14 = sbr.rel (0) target = $region13
    $region12: #{tpu_custom_call.1} parent=1 // pred_region
      _
    $region13: #{tpu_custom_call.1} parent=1 // pred_fallthru
      _
    %v15 = vld [vmem:[%s0] sm:$0xf]
    %v16 = vld [vmem:[%s1] sm:$0xff]
    %v17 = vld [vmem:[%s1 + $0x8] sm:$0xff]
    %v18 = vld [vmem:[%s1 + $0x10] sm:$0xff]
    %v19 = vld [vmem:[%s1 + $0x18] sm:$0xff]
    %v20 = vld [vmem:[%s2] sm:$0x1]
    %22 = vset.pattern.permute.xlu0 0
    %23 = vperm.xlu0 %22, %v16
    %v24 = vpop.permute.xlu0 %23
    %27 = vset.pattern.permute.xlu0 0
    %28 = vperm.xlu0 %27, %v17
    %v29 = vpop.permute.xlu0 %28
    %32 = vset.pattern.permute.xlu0 0
    %33 = vperm.xlu0 %32, %v18
    %v34 = vpop.permute.xlu0 %33
    %37 = vset.pattern.permute.xlu0 0
    %38 = vperm.xlu0 %37, %v19
    %v39 = vpop.permute.xlu0 %38
    %v41 = vperm.slane %v15, 0
    %v42 = vmul.f32 %v24, %v41
    %v43 = vmul.f32 %v29, %v41
    %v44 = vmul.f32 %v34, %v41
    %v45 = vmul.f32 %v39, %v41
    %v46 = vsub.f32 1.0, %v16
    %v47 = vsub.f32 1.0, %v17
    %v48 = vsub.f32 1.0, %v18
    %v49 = vsub.f32 1.0, %v19
    %51 = vset.pattern.permute.xlu0 0
    %52 = vperm.xlu0 %51, %v46
    %v53 = vpop.permute.xlu0 %52
    %56 = vset.pattern.permute.xlu0 0
    %57 = vperm.xlu0 %56, %v47
    %v58 = vpop.permute.xlu0 %57
    %61 = vset.pattern.permute.xlu0 0
    %62 = vperm.xlu0 %61, %v48
    %v63 = vpop.permute.xlu0 %62
    %66 = vset.pattern.permute.xlu0 0
    %67 = vperm.xlu0 %66, %v49
    %v68 = vpop.permute.xlu0 %67
    %v70 = vadd.f32 %v42, %v53
    %v71 = vadd.f32 %v43, %v58
    %v72 = vadd.f32 %v44, %v63
    %v73 = vadd.f32 %v45, %v68
    %74 = vset.pattern.permute.xlu0 4
    %75 = vperm.xlu0 %74, %v16
    %v76 = vpop.permute.xlu0 %75
    %78 = vset.pattern.permute.xlu0 4
    %79 = vperm.xlu0 %78, %v17
    %v80 = vpop.permute.xlu0 %79
    %82 = vset.pattern.permute.xlu0 4
    %83 = vperm.xlu0 %82, %v18
    %v84 = vpop.permute.xlu0 %83
    %86 = vset.pattern.permute.xlu0 4
    %87 = vperm.xlu0 %86, %v19
    %v88 = vpop.permute.xlu0 %87
    %v90 = vmul.f32 %v76, %v41
    %v91 = vmul.f32 %v80, %v41
    %v92 = vmul.f32 %v84, %v41
    %v93 = vmul.f32 %v88, %v41
    %v94 = vsub.f32 1.0, %v90
    %v95 = vsub.f32 1.0, %v91
    %v96 = vsub.f32 1.0, %v92
    %v97 = vsub.f32 1.0, %v93
    %v98 = vmul.f32 %v70, %v94
    %v99 = vmul.f32 %v71, %v95
    %v100 = vmul.f32 %v72, %v96
    %v101 = vmul.f32 %v73, %v97
    %102 = vset.pattern.permute.xlu0 1
    %103 = vperm.xlu0 %102, %v16
    %v104 = vpop.permute.xlu0 %103
    %106 = vset.pattern.permute.xlu0 1
    %107 = vperm.xlu0 %106, %v17
    %v108 = vpop.permute.xlu0 %107
    %110 = vset.pattern.permute.xlu0 1
    %111 = vperm.xlu0 %110, %v18
    %v112 = vpop.permute.xlu0 %111
    %114 = vset.pattern.permute.xlu0 1
    %115 = vperm.xlu0 %114, %v19
    %v116 = vpop.permute.xlu0 %115
    %v118 = vperm.slane %v15, 1
    %v119 = vmul.f32 %v104, %v118
    %v120 = vmul.f32 %v108, %v118
    %v121 = vmul.f32 %v112, %v118
    %v122 = vmul.f32 %v116, %v118
    %123 = vset.pattern.permute.xlu0 1
    %124 = vperm.xlu0 %123, %v46
    %v125 = vpop.permute.xlu0 %124
    %127 = vset.pattern.permute.xlu0 1
    %128 = vperm.xlu0 %127, %v47
    %v129 = vpop.permute.xlu0 %128
    %131 = vset.pattern.permute.xlu0 1
    %132 = vperm.xlu0 %131, %v48
    %v133 = vpop.permute.xlu0 %132
    %135 = vset.pattern.permute.xlu0 1
    %136 = vperm.xlu0 %135, %v49
    %v137 = vpop.permute.xlu0 %136
    %v139 = vadd.f32 %v119, %v125
    %v140 = vadd.f32 %v120, %v129
    %v141 = vadd.f32 %v121, %v133
    %v142 = vadd.f32 %v122, %v137
    %143 = vset.pattern.permute.xlu0 5
    %144 = vperm.xlu0 %143, %v16
    %v145 = vpop.permute.xlu0 %144
    %147 = vset.pattern.permute.xlu0 5
    %148 = vperm.xlu0 %147, %v17
    %v149 = vpop.permute.xlu0 %148
    %151 = vset.pattern.permute.xlu0 5
    %152 = vperm.xlu0 %151, %v18
    %v153 = vpop.permute.xlu0 %152
    %155 = vset.pattern.permute.xlu0 5
    %156 = vperm.xlu0 %155, %v19
    %v157 = vpop.permute.xlu0 %156
    %v159 = vmul.f32 %v145, %v118
    %v160 = vmul.f32 %v149, %v118
    %v161 = vmul.f32 %v153, %v118
    %v162 = vmul.f32 %v157, %v118
    %v163 = vsub.f32 1.0, %v159
    %v164 = vsub.f32 1.0, %v160
    %v165 = vsub.f32 1.0, %v161
    %v166 = vsub.f32 1.0, %v162
    %v167 = vmul.f32 %v139, %v163
    %v168 = vmul.f32 %v140, %v164
    %v169 = vmul.f32 %v141, %v165
    %v170 = vmul.f32 %v142, %v166
    %171 = vset.pattern.permute.xlu0 2
    %172 = vperm.xlu0 %171, %v16
    %v173 = vpop.permute.xlu0 %172
    %175 = vset.pattern.permute.xlu0 2
    %176 = vperm.xlu0 %175, %v17
    %v177 = vpop.permute.xlu0 %176
    %179 = vset.pattern.permute.xlu0 2
    %180 = vperm.xlu0 %179, %v18
    %v181 = vpop.permute.xlu0 %180
    %183 = vset.pattern.permute.xlu0 2
    %184 = vperm.xlu0 %183, %v19
    %v185 = vpop.permute.xlu0 %184
    %v187 = vperm.slane %v15, 2
    %v188 = vmul.f32 %v173, %v187
    %v189 = vmul.f32 %v177, %v187
    %v190 = vmul.f32 %v181, %v187
    %v191 = vmul.f32 %v185, %v187
    %192 = vset.pattern.permute.xlu0 2
    %193 = vperm.xlu0 %192, %v46
    %v194 = vpop.permute.xlu0 %193
    %196 = vset.pattern.permute.xlu0 2
    %197 = vperm.xlu0 %196, %v47
    %v198 = vpop.permute.xlu0 %197
    %200 = vset.pattern.permute.xlu0 2
    %201 = vperm.xlu0 %200, %v48
    %v202 = vpop.permute.xlu0 %201
    %204 = vset.pattern.permute.xlu0 2
    %205 = vperm.xlu0 %204, %v49
    %v206 = vpop.permute.xlu0 %205
    %v208 = vadd.f32 %v188, %v194
    %v209 = vadd.f32 %v189, %v198
    %v210 = vadd.f32 %v190, %v202
    %v211 = vadd.f32 %v191, %v206
    %212 = vset.pattern.permute.xlu0 6
    %213 = vperm.xlu0 %212, %v16
    %v214 = vpop.permute.xlu0 %213
    %216 = vset.pattern.permute.xlu0 6
    %217 = vperm.xlu0 %216, %v17
    %v218 = vpop.permute.xlu0 %217
    %220 = vset.pattern.permute.xlu0 6
    %221 = vperm.xlu0 %220, %v18
    %v222 = vpop.permute.xlu0 %221
    %224 = vset.pattern.permute.xlu0 6
    %225 = vperm.xlu0 %224, %v19
    %v226 = vpop.permute.xlu0 %225
    %v228 = vmul.f32 %v214, %v187
    %v229 = vmul.f32 %v218, %v187
    %v230 = vmul.f32 %v222, %v187
    %v231 = vmul.f32 %v226, %v187
    %v232 = vsub.f32 1.0, %v228
    %v233 = vsub.f32 1.0, %v229
    %v234 = vsub.f32 1.0, %v230
    %v235 = vsub.f32 1.0, %v231
    %v236 = vmul.f32 %v208, %v232
    %v237 = vmul.f32 %v209, %v233
    %v238 = vmul.f32 %v210, %v234
    %v239 = vmul.f32 %v211, %v235
    %240 = vset.pattern.permute.xlu0 3
    %241 = vperm.xlu0 %240, %v16
    %v242 = vpop.permute.xlu0 %241
    %244 = vset.pattern.permute.xlu0 3
    %245 = vperm.xlu0 %244, %v17
    %v246 = vpop.permute.xlu0 %245
    %248 = vset.pattern.permute.xlu0 3
    %249 = vperm.xlu0 %248, %v18
    %v250 = vpop.permute.xlu0 %249
    %252 = vset.pattern.permute.xlu0 3
    %253 = vperm.xlu0 %252, %v19
    %v254 = vpop.permute.xlu0 %253
    %v256 = vperm.slane %v15, 3
    %v257 = vmul.f32 %v242, %v256
    %v258 = vmul.f32 %v246, %v256
    %v259 = vmul.f32 %v250, %v256
    %v260 = vmul.f32 %v254, %v256
    %261 = vset.pattern.permute.xlu0 3
    %262 = vperm.xlu0 %261, %v46
    %v263 = vpop.permute.xlu0 %262
    %265 = vset.pattern.permute.xlu0 3
    %266 = vperm.xlu0 %265, %v47
    %v267 = vpop.permute.xlu0 %266
    %269 = vset.pattern.permute.xlu0 3
    %270 = vperm.xlu0 %269, %v48
    %v271 = vpop.permute.xlu0 %270
    %273 = vset.pattern.permute.xlu0 3
    %274 = vperm.xlu0 %273, %v49
    %v275 = vpop.permute.xlu0 %274
    %v277 = vadd.f32 %v257, %v263
    %v278 = vadd.f32 %v258, %v267
    %v279 = vadd.f32 %v259, %v271
    %v280 = vadd.f32 %v260, %v275
    %281 = vset.pattern.permute.xlu0 7
    %282 = vperm.xlu0 %281, %v16
    %v283 = vpop.permute.xlu0 %282
    %285 = vset.pattern.permute.xlu0 7
    %286 = vperm.xlu0 %285, %v17
    %v287 = vpop.permute.xlu0 %286
    %289 = vset.pattern.permute.xlu0 7
    %290 = vperm.xlu0 %289, %v18
    %v291 = vpop.permute.xlu0 %290
    %293 = vset.pattern.permute.xlu0 7
    %294 = vperm.xlu0 %293, %v19
    %v295 = vpop.permute.xlu0 %294
    %v297 = vmul.f32 %v283, %v256
    %v298 = vmul.f32 %v287, %v256
    %v299 = vmul.f32 %v291, %v256
    %v300 = vmul.f32 %v295, %v256
    %v301 = vsub.f32 1.0, %v297
    %v302 = vsub.f32 1.0, %v298
    %v303 = vsub.f32 1.0, %v299
    %v304 = vsub.f32 1.0, %v300
    %v305 = vmul.f32 %v277, %v301
    %v306 = vmul.f32 %v278, %v302
    %v307 = vmul.f32 %v279, %v303
    %v308 = vmul.f32 %v280, %v304
    %v309 = vmul.f32 %v98, %v167
    %v310 = vmul.f32 %v99, %v168
    %v311 = vmul.f32 %v100, %v169
    %v312 = vmul.f32 %v101, %v170
    %v313 = vmul.f32 %v236, %v305
    %v314 = vmul.f32 %v237, %v306
    %v315 = vmul.f32 %v238, %v307
    %v316 = vmul.f32 %v239, %v308
    %v317 = vmul.f32 %v309, %v313
    %v318 = vmul.f32 %v310, %v314
    %v319 = vmul.f32 %v311, %v315
    %v320 = vmul.f32 %v312, %v316
    %322 = vset.pattern.permute.xlu0 0
    %323 = vperm.xlu0 %322, %v20
    %v324 = vpop.permute.xlu0 %323
    %v326 = vperm.slane %v324, 0
    %v327 = vmul.f32 %v326, %v317
    %v328 = vsub.f32 1.0, %v327
    %329 = vset.pattern.permute.xlu0 1
    %330 = vperm.xlu0 %329, %v20
    %v331 = vpop.permute.xlu0 %330
    %v333 = vperm.slane %v331, 0
    %v334 = vmul.f32 %v333, %v317
    %v335 = vsub.f32 1.0, %v334
    %336 = vset.pattern.permute.xlu0 2
    %337 = vperm.xlu0 %336, %v20
    %v338 = vpop.permute.xlu0 %337
    %v340 = vperm.slane %v338, 0
    %v341 = vmul.f32 %v340, %v317
    %v342 = vsub.f32 1.0, %v341
    %343 = vset.pattern.permute.xlu0 3
    %344 = vperm.xlu0 %343, %v20
    %v345 = vpop.permute.xlu0 %344
    %v347 = vperm.slane %v345, 0
    %v348 = vmul.f32 %v347, %v317
    %v349 = vsub.f32 1.0, %v348
    %350 = vset.pattern.permute.xlu0 4
    %351 = vperm.xlu0 %350, %v20
    %v352 = vpop.permute.xlu0 %351
    %v354 = vperm.slane %v352, 0
    %v355 = vmul.f32 %v354, %v317
    %v356 = vsub.f32 1.0, %v355
    %357 = vset.pattern.permute.xlu0 5
    %358 = vperm.xlu0 %357, %v20
    %v359 = vpop.permute.xlu0 %358
    %v361 = vperm.slane %v359, 0
    %v362 = vmul.f32 %v361, %v317
    %v363 = vsub.f32 1.0, %v362
    %364 = vset.pattern.permute.xlu0 6
    %365 = vperm.xlu0 %364, %v20
    %v366 = vpop.permute.xlu0 %365
    %v368 = vperm.slane %v366, 0
    %v369 = vmul.f32 %v368, %v317
    %v370 = vsub.f32 1.0, %v369
    %371 = vset.pattern.permute.xlu0 7
    %372 = vperm.xlu0 %371, %v20
    %v373 = vpop.permute.xlu0 %372
    %v375 = vperm.slane %v373, 0
    %v376 = vmul.f32 %v375, %v317
    %v377 = vsub.f32 1.0, %v376
    %378 = vset.pattern.permute.xlu0 8
    %379 = vperm.xlu0 %378, %v20
    %v380 = vpop.permute.xlu0 %379
    %v382 = vperm.slane %v380, 0
    %v383 = vmul.f32 %v382, %v318
    %v384 = vsub.f32 1.0, %v383
    %385 = vset.pattern.permute.xlu0 9
    %386 = vperm.xlu0 %385, %v20
    %v387 = vpop.permute.xlu0 %386
    %v389 = vperm.slane %v387, 0
    %v390 = vmul.f32 %v389, %v318
    %v391 = vsub.f32 1.0, %v390
    %392 = vset.pattern.permute.xlu0 10
    %393 = vperm.xlu0 %392, %v20
    %v394 = vpop.permute.xlu0 %393
    %v396 = vperm.slane %v394, 0
    %v397 = vmul.f32 %v396, %v318
    %v398 = vsub.f32 1.0, %v397
    %399 = vset.pattern.permute.xlu0 11
    %400 = vperm.xlu0 %399, %v20
    %v401 = vpop.permute.xlu0 %400
    %v403 = vperm.slane %v401, 0
    %v404 = vmul.f32 %v403, %v318
    %v405 = vsub.f32 1.0, %v404
    %406 = vset.pattern.permute.xlu0 12
    %407 = vperm.xlu0 %406, %v20
    %v408 = vpop.permute.xlu0 %407
    %v410 = vperm.slane %v408, 0
    %v411 = vmul.f32 %v410, %v318
    %v412 = vsub.f32 1.0, %v411
    %413 = vset.pattern.permute.xlu0 13
    %414 = vperm.xlu0 %413, %v20
    %v415 = vpop.permute.xlu0 %414
    %v417 = vperm.slane %v415, 0
    %v418 = vmul.f32 %v417, %v318
    %v419 = vsub.f32 1.0, %v418
    %420 = vset.pattern.permute.xlu0 14
    %421 = vperm.xlu0 %420, %v20
    %v422 = vpop.permute.xlu0 %421
    %v424 = vperm.slane %v422, 0
    %v425 = vmul.f32 %v424, %v318
    %v426 = vsub.f32 1.0, %v425
    %427 = vset.pattern.permute.xlu0 15
    %428 = vperm.xlu0 %427, %v20
    %v429 = vpop.permute.xlu0 %428
    %v431 = vperm.slane %v429, 0
    %v432 = vmul.f32 %v431, %v318
    %v433 = vsub.f32 1.0, %v432
    %434 = vset.pattern.permute.xlu0 16
    %435 = vperm.xlu0 %434, %v20
    %v436 = vpop.permute.xlu0 %435
    %v438 = vperm.slane %v436, 0
    %v439 = vmul.f32 %v438, %v319
    %v440 = vsub.f32 1.0, %v439
    %441 = vset.pattern.permute.xlu0 17
    %442 = vperm.xlu0 %441, %v20
    %v443 = vpop.permute.xlu0 %442
    %v445 = vperm.slane %v443, 0
    %v446 = vmul.f32 %v445, %v319
    %v447 = vsub.f32 1.0, %v446
    %448 = vset.pattern.permute.xlu0 18
    %449 = vperm.xlu0 %448, %v20
    %v450 = vpop.permute.xlu0 %449
    %v452 = vperm.slane %v450, 0
    %v453 = vmul.f32 %v452, %v319
    %v454 = vsub.f32 1.0, %v453
    %455 = vset.pattern.permute.xlu0 19
    %456 = vperm.xlu0 %455, %v20
    %v457 = vpop.permute.xlu0 %456
    %v459 = vperm.slane %v457, 0
    %v460 = vmul.f32 %v459, %v319
    %v461 = vsub.f32 1.0, %v460
    %462 = vset.pattern.permute.xlu0 20
    %463 = vperm.xlu0 %462, %v20
    %v464 = vpop.permute.xlu0 %463
    %v466 = vperm.slane %v464, 0
    %v467 = vmul.f32 %v466, %v319
    %v468 = vsub.f32 1.0, %v467
    %469 = vset.pattern.permute.xlu0 21
    %470 = vperm.xlu0 %469, %v20
    %v471 = vpop.permute.xlu0 %470
    %v473 = vperm.slane %v471, 0
    %v474 = vmul.f32 %v473, %v319
    %v475 = vsub.f32 1.0, %v474
    %476 = vset.pattern.permute.xlu0 22
    %477 = vperm.xlu0 %476, %v20
    %v478 = vpop.permute.xlu0 %477
    %v480 = vperm.slane %v478, 0
    %v481 = vmul.f32 %v480, %v319
    %v482 = vsub.f32 1.0, %v481
    %483 = vset.pattern.permute.xlu0 23
    %484 = vperm.xlu0 %483, %v20
    %v485 = vpop.permute.xlu0 %484
    %v487 = vperm.slane %v485, 0
    %v488 = vmul.f32 %v487, %v319
    %v489 = vsub.f32 1.0, %v488
    %490 = vset.pattern.permute.xlu0 24
    %491 = vperm.xlu0 %490, %v20
    %v492 = vpop.permute.xlu0 %491
    %v494 = vperm.slane %v492, 0
    %v495 = vmul.f32 %v494, %v320
    %v496 = vsub.f32 1.0, %v495
    %497 = vset.pattern.permute.xlu0 25
    %498 = vperm.xlu0 %497, %v20
    %v499 = vpop.permute.xlu0 %498
    %v501 = vperm.slane %v499, 0
    %v502 = vmul.f32 %v501, %v320
    %v503 = vsub.f32 1.0, %v502
    %504 = vset.pattern.permute.xlu0 26
    %505 = vperm.xlu0 %504, %v20
    %v506 = vpop.permute.xlu0 %505
    %v508 = vperm.slane %v506, 0
    %v509 = vmul.f32 %v508, %v320
    %v510 = vsub.f32 1.0, %v509
    %511 = vset.pattern.permute.xlu0 27
    %512 = vperm.xlu0 %511, %v20
    %v513 = vpop.permute.xlu0 %512
    %v515 = vperm.slane %v513, 0
    %v516 = vmul.f32 %v515, %v320
    %v517 = vsub.f32 1.0, %v516
    %518 = vset.pattern.permute.xlu0 28
    %519 = vperm.xlu0 %518, %v20
    %v520 = vpop.permute.xlu0 %519
    %v522 = vperm.slane %v520, 0
    %v523 = vmul.f32 %v522, %v320
    %v524 = vsub.f32 1.0, %v523
    %525 = vset.pattern.permute.xlu0 29
    %526 = vperm.xlu0 %525, %v20
    %v527 = vpop.permute.xlu0 %526
    %v529 = vperm.slane %v527, 0
    %v530 = vmul.f32 %v529, %v320
    %v531 = vsub.f32 1.0, %v530
    %532 = vset.pattern.permute.xlu0 30
    %533 = vperm.xlu0 %532, %v20
    %v534 = vpop.permute.xlu0 %533
    %v536 = vperm.slane %v534, 0
    %v537 = vmul.f32 %v536, %v320
    %v538 = vsub.f32 1.0, %v537
    %539 = vset.pattern.permute.xlu0 31
    %540 = vperm.xlu0 %539, %v20
    %v541 = vpop.permute.xlu0 %540
    %v543 = vperm.slane %v541, 0
    %v544 = vmul.f32 %v543, %v320
    %v545 = vsub.f32 1.0, %v544
    %v547 = vrot.slane %v335, 1
    %v549 = vmul.f32 %v328, %v547
    %v551 = vrot.slane %v349, 1
    %v553 = vmul.f32 %v342, %v551
    %v555 = vrot.slane %v363, 1
    %v557 = vmul.f32 %v356, %v555
    %v559 = vrot.slane %v377, 1
    %v561 = vmul.f32 %v370, %v559
    %v563 = vrot.slane %v391, 1
    %v565 = vmul.f32 %v384, %v563
    %v567 = vrot.slane %v405, 1
    %v569 = vmul.f32 %v398, %v567
    %v571 = vrot.slane %v419, 1
    %v573 = vmul.f32 %v412, %v571
    %v575 = vrot.slane %v433, 1
    %v577 = vmul.f32 %v426, %v575
    %v579 = vrot.slane %v447, 1
    %v581 = vmul.f32 %v440, %v579
    %v583 = vrot.slane %v461, 1
    %v585 = vmul.f32 %v454, %v583
    %v587 = vrot.slane %v475, 1
    %v589 = vmul.f32 %v468, %v587
    %v591 = vrot.slane %v489, 1
    %v593 = vmul.f32 %v482, %v591
    %v595 = vrot.slane %v503, 1
    %v597 = vmul.f32 %v496, %v595
    %v599 = vrot.slane %v517, 1
    %v601 = vmul.f32 %v510, %v599
    %v603 = vrot.slane %v531, 1
    %v605 = vmul.f32 %v524, %v603
    %v607 = vrot.slane %v545, 1
    %v609 = vmul.f32 %v538, %v607
    %v611 = vrot.slane %v553, 2
    %v613 = vmul.f32 %v549, %v611
    %v615 = vrot.slane %v561, 2
    %v617 = vmul.f32 %v557, %v615
    %v619 = vrot.slane %v569, 2
    %v621 = vmul.f32 %v565, %v619
    %v623 = vrot.slane %v577, 2
    %v625 = vmul.f32 %v573, %v623
    %v627 = vrot.slane %v585, 2
    %v629 = vmul.f32 %v581, %v627
    %v631 = vrot.slane %v593, 2
    %v633 = vmul.f32 %v589, %v631
    %v635 = vrot.slane %v601, 2
    %v637 = vmul.f32 %v597, %v635
    %v639 = vrot.slane %v609, 2
    %v641 = vmul.f32 %v605, %v639
    %v643 = vrot.slane %v617, 4
    %v645 = vmul.f32 %v613, %v643
    %v647 = vrot.slane %v625, 4
    %v649 = vmul.f32 %v621, %v647
    %v651 = vrot.slane %v633, 4
    %v653 = vmul.f32 %v629, %v651
    %v655 = vrot.slane %v641, 4
    %v657 = vmul.f32 %v637, %v655
    %v658 = vmul.f32 %v645, %v649
    %v659 = vmul.f32 %v653, %v657
    %v660 = vmul.f32 %v658, %v659
    %v661 = vsub.f32 1.0, %v660
    %vm662 = vcmask 57344
    %663 = vst.msk [vmem:[#allocation2] sm:$0x1] %vm662, %v661
    // Predicated region
    $region14: #{tpu_custom_call.1} parent=1 // pred_check
      _
    $region15: #{tpu_custom_call.1} parent=1 // pred_check_branch
      %665 = sbr.rel (0) target = $region17
    $region16: #{tpu_custom_call.1} parent=1 // pred_region
      %667 = vsyncadd [#allocation3], 0
      %s669 = sshll.u32 [#allocation2], 4
      %s670 = int_to_ptr.vmem [resolvable:$true] %s669
      %s671 = sshll.u32 %s3, 4
      %s672 = int_to_ptr.hbm [resolvable:$true] %s671
      %674 = dma.vmem_to_hbm [thread:$0]  %s670, 16, %s672, [#allocation3]
    $region17: #{tpu_custom_call.1} parent=1 // pred_fallthru
      _
    // Predicated region
    $region18: #{tpu_custom_call.1} parent=1 // pred_check
      _
    $region19: #{tpu_custom_call.1} parent=1 // pred_check_branch
      %676 = sbr.rel (0) target = $region21
    $region20: #{tpu_custom_call.1} parent=1 // pred_region
      %678 = dma.done [#allocation3], 16
    $region21: #{tpu_custom_call.1} parent=1 // pred_fallthru
      _
    %679 = vsyncpa [#allocation3], 1

</llo_original>
